<compile_context>
chip_gen: v6e
topology: v6e:2x2x1
jax: 0.10.0
libtpu: 0.0.40
codegen_flags: <defaults>
</compile_context>

<pallas_src>
import functools

import jax
import jax.numpy as jnp
from jax import lax
from jax.experimental import pallas as pl
from jax.experimental.pallas import tpu as pltpu


def _pow_alpha(x, alpha):
    """x ** alpha, avoiding the transcendental exp/log path for integer alpha."""
    if alpha == 1.0:
        return x
    if float(alpha).is_integer() and alpha >= 1.0:
        return lax.integer_pow(x, int(alpha))      # VPU multiplies
    # TODO(synk): non-integer alpha goes through exp(alpha*log(x)); x==0 entries
    # are fine forward (0) but would NaN autodiff, matching the PyTorch module.
    return x ** alpha


def _hinge_kernel(scores_ref, target_ref, mask_ref, pos_ref, neg_ref, *,
                  min_margin, margin_alpha, dep_tile, dep_size, mask_dep):
    # Block is (tb, G, td): tb batch rows, full governor axis, a lane tile of D.
    s = scores_ref[...].astype(jnp.float32)
    t = target_ref[...].astype(jnp.float32)       # 0/1 gold adjacency
    m = mask_ref[...].astype(jnp.float32)         # 0/1 validity mask

    non_gov = (1.0 - t) * m

    # Dynamic thresholds: column-wise over the governor axis (axis 1).
    # min_margin folded into the reduced (tb, 1, td) arrays -> G-fold cheaper
    # than subtracting it per element.
    thr_pos = jnp.max(s * non_gov, axis=1, keepdims=True) + min_margin
    thr_neg = jnp.min(s * t, axis=1, keepdims=True) - min_margin

    # relu(x)*t == x*(x>0)*t exactly; drops a compare + f32 cast + multiply
    # per element per branch.
    nge_pos = jnp.maximum(thr_pos - s, 0.0) * t        # gold arcs
    nge_neg = jnp.maximum(s - thr_neg, 0.0) * non_gov  # gold non-arcs
    nge_pos = _pow_alpha(nge_pos, margin_alpha)
    nge_neg = _pow_alpha(nge_neg, margin_alpha)

    if mask_dep:
        # Ragged dependent-axis edge: mask by global index (edge-block
        # contents are unspecified, so zero-padding semantics cannot be
        # relied on).  Only emitted when D % td != 0.
        dep = (pl.program_id(1) * dep_tile
               + lax.broadcasted_iota(jnp.int32, (1, 1, dep_tile), 2))
        valid = dep < dep_size
        nge_pos = jnp.where(valid, nge_pos, 0.0)
        nge_neg = jnp.where(valid, nge_neg, 0.0)

    # Per-tile partial sums (no cross-step accumulator -> both axes parallel).
    pos_ref[...] = jnp.sum(nge_pos, keepdims=True)
    neg_ref[...] = jnp.sum(nge_neg, keepdims=True)


def _tpu_vmem_bytes():
    """Best-effort VMEM capacity query; conservative (v7x-safe) fallback."""
    try:
        info = pltpu.get_tpu_info()
        for attr in ("vmem_capacity_bytes", "vmem_bytes", "vmem_size_bytes"):
            v = getattr(info, attr, None)
            if v:
                return int(v)
    except Exception:
        pass
    return 64 * 1024 * 1024


def binary_hinge_loss_dyn_threshold(arc_scores, target_arc_adja, mask,
                                    pos_neg_weights=None,
                                    min_margin=1.0, margin_alpha=1.0,
                                    block_input_bytes=None,
                                    vmem_limit_bytes=None):
    """Pallas-backed equivalent of the PyTorch module forward.

    target_arc_adja / mask may be passed in a narrow dtype (int8 / bf16);
    they are streamed from HBM at that width and widened to f32 in VMEM.
    """
    B, G, D = arc_scores.shape
    itemsizes = (jnp.dtype(arc_scores.dtype).itemsize
                 + jnp.dtype(target_arc_adja.dtype).itemsize
                 + jnp.dtype(mask.dtype).itemsize)

    # ---- generation-specific tile / VMEM budget -----------------------------
    vmem_cap = _tpu_vmem_bytes()
    big_vmem = vmem_cap >= (100 << 20)            # v5e / v6e (128 MiB)
    if block_input_bytes is None:
        block_input_bytes = (7 << 20) if big_vmem else (3 << 20)
    if vmem_limit_bytes is None:
        vmem_limit_bytes = (64 << 20) if big_vmem else (40 << 20)

    # ---- tile sizing: no padding, no extra HBM pass --------------------------
    row_bytes = G * D * itemsizes                 # one full batch row slab
    if row_bytes > block_input_bytes and D > 128:
        # A single batch row is too big: tile the dependent (lane) axis in
        # multiples of 128, minimum 512 for long DMA chunks when D allows.
        tb = 1
        td = (block_input_bytes // (G * itemsizes)) // 128 * 128
        td = max(td, 512 if D >= 512 else 128)
        td = min(td, (D // 128) * 128)
        ndt = pl.cdiv(D, td)
        mask_dep = (D % td) != 0                  # ragged lane edge -> in-kernel mask
    else:
        td = D
        ndt = 1
        mask_dep = False
        # Largest divisor of B within the block budget (B never ragged).
        divs = [d for d in range(B, 0, -1) if B % d == 0]
        tb = next((d for d in divs if d * row_bytes <= block_input_bytes), 1)
        # Enough grid steps to feed the pipeline / both v7x TensorCores.
        while (B // tb) * ndt < 8 and tb > 1:
            tb = next(d for d in divs if d < tb)

    nbt = B // tb
    grid = (nbt, ndt)

    # Safety: if a pathological shape forces an oversized block, bump the limit
    # (never exceeding ~90% of physical VMEM).  No-op in the normal regime.
    block_elems = tb * G * td
    est_vmem = 2 * block_elems * itemsizes + 4 * block_elems * 4 + (1 << 20)
    vmem_limit_bytes = max(vmem_limit_bytes,
                           min(est_vmem, int(vmem_cap * 0.9)))

    kernel = functools.partial(
        _hinge_kernel,
        min_margin=float(min_margin), margin_alpha=float(margin_alpha),
        dep_tile=td, dep_size=D, mask_dep=mask_dep)

    in_spec = pl.BlockSpec((tb, G, td), lambda i, j: (i, 0, j))
    out_spec = pl.BlockSpec((1, 1, 1), lambda i, j: (i * ndt + j, 0, 0))
    part_shape = jax.ShapeDtypeStruct((nbt * ndt, 1, 1), jnp.float32)

    pos_parts, neg_parts = pl.pallas_call(
        kernel,
        out_shape=(part_shape, part_shape),
        grid_spec=pltpu.PrefetchScalarGridSpec(
            num_scalar_prefetch=0,
            grid=grid,
            in_specs=[in_spec, in_spec, in_spec],
            out_specs=(out_spec, out_spec),
        ),
        compiler_params=pltpu.CompilerParams(
            dimension_semantics=("parallel", "parallel"),
            vmem_limit_bytes=int(vmem_limit_bytes)),
    )(arc_scores, target_arc_adja, mask)

    pos_sum = jnp.sum(pos_parts)
    neg_sum = jnp.sum(neg_parts)

    if pos_neg_weights is not None:
        w = pos_neg_weights.astype(jnp.float32)
        return w[0] * pos_sum + w[1] * neg_sum + 1.0 / jnp.sum(w ** 3)
    return pos_sum + neg_sum


def reference_loss(arc_scores, target, mask, pos_neg_weights=None,
                   min_margin=1.0, margin_alpha=1.0):
    """Pure-JAX transcription of the PyTorch forward (for correctness check)."""
    non_gov = (1.0 - target) * mask
    s_maxnongov = jnp.max(arc_scores * non_gov, axis=1, keepdims=True)
    s_mingov = jnp.min(arc_scores * target, axis=1, keepdims=True)

    nge = min_margin - (arc_scores - s_maxnongov)
    nge = nge * ((nge > 0).astype(jnp.float32) * target)
    if margin_alpha != 1.0:
        nge = nge ** margin_alpha
    loss = jnp.sum(nge)
    if pos_neg_weights is not None:
        loss = loss * pos_neg_weights[0]

    nge = min_margin - (s_mingov - arc_scores)
    nge = nge * ((nge > 0).astype(jnp.float32) * non_gov)
    if margin_alpha != 1.0:
        nge = nge ** margin_alpha
    if pos_neg_weights is not None:
        loss = loss + pos_neg_weights[1] * jnp.sum(nge) \
               + 1.0 / jnp.sum(pos_neg_weights ** 3)
    else:
        loss = loss + jnp.sum(nge)
    return loss


def _check(got, want, name):
    got, want = float(got), float(want)
    assert abs(got - want) <= 1e-3 * max(1.0, abs(want)), (name, got, want)


if __name__ == "__main__":
    key = jax.random.PRNGKey(0)
    k_s, k_t, k_m, k_s2, k_t2, k_m2 = jax.random.split(key, 6)

    # ---- case A: small shape, no dependent-axis tiling ----------------------
    B, G, D = 2, 16, 16  # batch, governors, dependents
    arc_scores = jax.random.normal(k_s, (B, G, D), dtype=jnp.float32)
    # target / mask produced narrow (int8) by the caller -> half the HBM bytes.
    target_i8 = (jax.random.uniform(k_t, (B, G, D)) > 0.7).astype(jnp.int8)
    mask_i8 = (jax.random.uniform(k_m, (B, G, D)) > 0.1).astype(jnp.int8)
    target_f32 = target_i8.astype(jnp.float32)
    mask_f32 = mask_i8.astype(jnp.float32)

    # case 1: module defaults (min_margin=1, margin_alpha=1, no weights)
    loss = binary_hinge_loss_dyn_threshold(arc_scores, target_i8, mask_i8)
    jax.block_until_ready(loss)
    _check(loss, reference_loss(arc_scores, target_f32, mask_f32), "default")

    # case 2: with pos_neg_weights
    w = jnp.array([1.5, 0.5], dtype=jnp.float32)
    loss_w = binary_hinge_loss_dyn_threshold(arc_scores, target_i8, mask_i8,
                                             pos_neg_weights=w)
    jax.block_until_ready(loss_w)
    _check(loss_w,
           reference_loss(arc_scores, target_f32, mask_f32, pos_neg_weights=w),
           "weighted")

    # case 3: integer margin_alpha (exercises the multiply-based pow path)
    loss_a = binary_hinge_loss_dyn_threshold(arc_scores, target_i8, mask_i8,
                                             min_margin=0.5, margin_alpha=2.0)
    jax.block_until_ready(loss_a)
    _check(loss_a,
           reference_loss(arc_scores, target_f32, mask_f32,
                          min_margin=0.5, margin_alpha=2.0),
           "alpha2")

    # ---- case B: force the lane-tiled + ragged-D (index-masked) path --------
    B2, G2, D2 = 2, 8, 200                       # D2 > 128, not a multiple of 128
    s2 = jax.random.normal(k_s2, (B2, G2, D2), dtype=jnp.float32)
    t2 = (jax.random.uniform(k_t2, (B2, G2, D2)) > 0.7).astype(jnp.int8)
    m2 = (jax.random.uniform(k_m2, (B2, G2, D2)) > 0.1).astype(jnp.int8)
    loss2 = binary_hinge_loss_dyn_threshold(s2, t2, m2,
                                            block_input_bytes=4096)
    jax.block_until_ready(loss2)
    _check(loss2,
           reference_loss(s2, t2.astype(jnp.float32), m2.astype(jnp.float32)),
           "ragged_d")

    print("KERNEL_OK")
</pallas_src>

<mosaic_0001>
module attributes {stable_mosaic.version = 11 : i64} {
  func.func @_hinge_kernel(%arg0: i32, %arg1: i32, %arg2: memref<1x16x16xf32, #tpu.memory_space<vmem>>, %arg3: memref<1x16x16xi8, #tpu.memory_space<vmem>>, %arg4: memref<1x16x16xi8, #tpu.memory_space<vmem>>, %arg5: memref<1x1x1xf32, #tpu.memory_space<vmem>>, %arg6: memref<1x1x1xf32, #tpu.memory_space<vmem>>) attributes {dimension_semantics = [#tpu.dimension_semantics<parallel>, #tpu.dimension_semantics<parallel>], iteration_bounds = array<i64: 2, 1>, scalar_prefetch = 0 : i64, scratch_operands = 0 : i64, tpu.core_type = #tpu.core_type<tc>, window_params = [{transform_indices = @transform_0, window_bounds = array<i64: 1, 16, 16>}, {transform_indices = @transform_1, window_bounds = array<i64: 1, 16, 16>}, {transform_indices = @transform_2, window_bounds = array<i64: 1, 16, 16>}, {transform_indices = @transform_3, window_bounds = array<i64: 1, 1, 1>}, {transform_indices = @transform_4, window_bounds = array<i64: 1, 1, 1>}]} {
    %c0 = arith.constant 0 : index
    %c0_0 = arith.constant 0 : index
    %c0_1 = arith.constant 0 : index
    %0 = vector.load %arg2[%c0, %c0_0, %c0_1] : memref<1x16x16xf32, #tpu.memory_space<vmem>>, vector<1x16x16xf32>
    %c0_2 = arith.constant 0 : index
    %c0_3 = arith.constant 0 : index
    %c0_4 = arith.constant 0 : index
    %1 = vector.load %arg3[%c0_2, %c0_3, %c0_4] : memref<1x16x16xi8, #tpu.memory_space<vmem>>, vector<1x16x16xi8>
    %2 = arith.sitofp %1 : vector<1x16x16xi8> to vector<1x16x16xf32>
    %c0_5 = arith.constant 0 : index
    %c0_6 = arith.constant 0 : index
    %c0_7 = arith.constant 0 : index
    %3 = vector.load %arg4[%c0_5, %c0_6, %c0_7] : memref<1x16x16xi8, #tpu.memory_space<vmem>>, vector<1x16x16xi8>
    %4 = arith.sitofp %3 : vector<1x16x16xi8> to vector<1x16x16xf32>
    %cst = arith.constant 1.000000e+00 : f32
    %5 = vector.broadcast %cst : f32 to vector<1x16x16xf32>
    %6 = arith.subf %5, %2 : vector<1x16x16xf32>
    %7 = arith.mulf %6, %4 : vector<1x16x16xf32>
    %8 = arith.mulf %0, %7 : vector<1x16x16xf32>
    %cst_8 = arith.constant dense<0xFF800000> : vector<1x16xf32>
    %9 = vector.multi_reduction <maximumf>, %8, %cst_8 [1] : vector<1x16x16xf32> to vector<1x16xf32>
    %10 = vector.shape_cast %9 : vector<1x16xf32> to vector<1x1x16xf32>
    %cst_9 = arith.constant 1.000000e+00 : f32
    %11 = vector.broadcast %cst_9 : f32 to vector<1x1x16xf32>
    %12 = arith.addf %10, %11 : vector<1x1x16xf32>
    %13 = arith.mulf %0, %2 : vector<1x16x16xf32>
    %cst_10 = arith.constant dense<0x7F800000> : vector<1x16xf32>
    %14 = vector.multi_reduction <minimumf>, %13, %cst_10 [1] : vector<1x16x16xf32> to vector<1x16xf32>
    %15 = vector.shape_cast %14 : vector<1x16xf32> to vector<1x1x16xf32>
    %cst_11 = arith.constant 1.000000e+00 : f32
    %16 = vector.broadcast %cst_11 : f32 to vector<1x1x16xf32>
    %17 = arith.subf %15, %16 : vector<1x1x16xf32>
    %18 = vector.broadcast %12 : vector<1x1x16xf32> to vector<1x16x16xf32>
    %19 = arith.subf %18, %0 : vector<1x16x16xf32>
    %cst_12 = arith.constant 0.000000e+00 : f32
    %20 = vector.broadcast %cst_12 : f32 to vector<1x16x16xf32>
    %21 = arith.maximumf %19, %20 : vector<1x16x16xf32>
    %22 = arith.mulf %21, %2 : vector<1x16x16xf32>
    %23 = vector.broadcast %17 : vector<1x1x16xf32> to vector<1x16x16xf32>
    %24 = arith.subf %0, %23 : vector<1x16x16xf32>
    %cst_13 = arith.constant 0.000000e+00 : f32
    %25 = vector.broadcast %cst_13 : f32 to vector<1x16x16xf32>
    %26 = arith.maximumf %24, %25 : vector<1x16x16xf32>
    %27 = arith.mulf %26, %7 : vector<1x16x16xf32>
    %28 = vector.shape_cast %22 : vector<1x16x16xf32> to vector<1x1x16x16xf32>
    %cst_14 = arith.constant dense<0.000000e+00> : vector<1xf32>
    %29 = vector.multi_reduction <add>, %28, %cst_14 [1, 2, 3] : vector<1x1x16x16xf32> to vector<1xf32>
    %30 = vector.shape_cast %29 : vector<1xf32> to vector<1x1x1x1xf32>
    %31 = vector.extract %30[0, 0, 0, 0] : f32 from vector<1x1x1x1xf32>
    %32 = vector.broadcast %31 : f32 to vector<1x1x1xf32>
    %c0_15 = arith.constant 0 : index
    %c0_16 = arith.constant 0 : index
    %c0_17 = arith.constant 0 : index
    %33 = vector.load %arg5[%c0_15, %c0_16, %c0_17] : memref<1x1x1xf32, #tpu.memory_space<vmem>>, vector<1x1x1xf32>
    tpu.vector_store %arg5[%c0_15, %c0_16, %c0_17], %32 {strides = array<i32>} : memref<1x1x1xf32, #tpu.memory_space<vmem>>, vector<1x1x1xf32>,
    %34 = vector.shape_cast %27 : vector<1x16x16xf32> to vector<1x1x16x16xf32>
    %cst_18 = arith.constant dense<0.000000e+00> : vector<1xf32>
    %35 = vector.multi_reduction <add>, %34, %cst_18 [1, 2, 3] : vector<1x1x16x16xf32> to vector<1xf32>
    %36 = vector.shape_cast %35 : vector<1xf32> to vector<1x1x1x1xf32>
    %37 = vector.extract %36[0, 0, 0, 0] : f32 from vector<1x1x1x1xf32>
    %38 = vector.broadcast %37 : f32 to vector<1x1x1xf32>
    %c0_19 = arith.constant 0 : index
    %c0_20 = arith.constant 0 : index
    %c0_21 = arith.constant 0 : index
    %39 = vector.load %arg6[%c0_19, %c0_20, %c0_21] : memref<1x1x1xf32, #tpu.memory_space<vmem>>, vector<1x1x1xf32>
    tpu.vector_store %arg6[%c0_19, %c0_20, %c0_21], %38 {strides = array<i32>} : memref<1x1x1xf32, #tpu.memory_space<vmem>>, vector<1x1x1xf32>,
    return
  }
  func.func @transform_0(%arg0: i32, %arg1: i32) -> (i32, i32, i32) {
    %c0_i32 = arith.constant 0 : i32
    %c0_i32_0 = arith.constant 0 : i32
    return %arg0, %c0_i32, %arg1 : i32, i32, i32
  }
  func.func @transform_1(%arg0: i32, %arg1: i32) -> (i32, i32, i32) {
    %c0_i32 = arith.constant 0 : i32
    %c0_i32_0 = arith.constant 0 : i32
    return %arg0, %c0_i32, %arg1 : i32, i32, i32
  }
  func.func @transform_2(%arg0: i32, %arg1: i32) -> (i32, i32, i32) {
    %c0_i32 = arith.constant 0 : i32
    %c0_i32_0 = arith.constant 0 : i32
    return %arg0, %c0_i32, %arg1 : i32, i32, i32
  }
  func.func @transform_3(%arg0: i32, %arg1: i32) -> (i32, i32, i32) {
    %c1_i32 = arith.constant 1 : i32
    %0 = arith.muli %arg0, %c1_i32 : i32
    %1 = arith.addi %0, %arg1 : i32
    %c0_i32 = arith.constant 0 : i32
    %c0_i32_0 = arith.constant 0 : i32
    %c0_i32_1 = arith.constant 0 : i32
    return %1, %c0_i32, %c0_i32_0 : i32, i32, i32
  }
  func.func @transform_4(%arg0: i32, %arg1: i32) -> (i32, i32, i32) {
    %c1_i32 = arith.constant 1 : i32
    %0 = arith.muli %arg0, %c1_i32 : i32
    %1 = arith.addi %0, %arg1 : i32
    %c0_i32 = arith.constant 0 : i32
    %c0_i32_0 = arith.constant 0 : i32
    %c0_i32_1 = arith.constant 0 : i32
    return %1, %c0_i32, %c0_i32_0 : i32, i32, i32
  }
}

</mosaic_0001>

<llo_original>
// kernel: tpu_custom_call.1
$region0: #{tpu_custom_call.1}
  #allocation0 [shape = 'u32[]', space=smem, size = 0x4, offset = 0x4, fixed_abs, tag = 'smem constant byte address 0x4 - core index']
  #allocation1 [shape = 'u32[144,128]{1,0:T(1,128)}', space=vmem, size = 0x12000, scoped, tag = 'internal scratch']
  %s0 = inlined_call_operand.hbm [shape: f32[2,16,16], index: 0, kind: input, shape index: {}]
  %s1 = inlined_call_operand.hbm [shape: s8[2,16,16], index: 1, kind: input, shape index: {}]
  %s2 = inlined_call_operand.hbm [shape: s8[2,16,16], index: 2, kind: input, shape index: {}]
  %s3 = inlined_call_operand.vmem [shape: f32[2,1,1], index: 3, kind: output, shape index: {0}]
  %s4 = inlined_call_operand.vmem [shape: f32[2,1,1], index: 4, kind: output, shape index: {1}]
  %5 = xla_tuple %s3, %s4
  %s6 = sld [smem:[#allocation0]]
  $region65: #{tpu_custom_call.1} parent=0
    _
  %s8 = ssub.s32 1, %s6
  %s9 = scalar_select 0, %s8, %s6
  $region1: #{tpu_custom_call.1} parent=0
    #allocation2 [shape = 'u8[16384]{0}', space=vmem, size = 0x4000, scoped, tag = 'input window, operand 0']
    #allocation3 [shape = 's32[2]{0}', space=sflag, size = 0x8, scoped, tag = 'scoped memory for tpu_custom_call.1']
    #allocation4 [shape = 'u8[4096]{0}', space=vmem, size = 0x1000, scoped, tag = 'input window, operand 1']
    #allocation5 [shape = 's32[2]{0}', space=sflag, size = 0x8, scoped, tag = 'scoped memory for tpu_custom_call.1']
    #allocation6 [shape = 'u8[4096]{0}', space=vmem, size = 0x1000, scoped, tag = 'input window, operand 2']
    %10 = vsyncpa [#allocation3], 0
    %s11 = scalar_lea.sflag [#allocation3], 1
    %12 = vsyncpa %s11, 0
    %13 = vsyncpa [#allocation5], 0
    %s14 = scalar_lea.sflag [#allocation5], 1
    %15 = vsyncpa %s14, 0
    loop: start=0, step=1, limit=4
    $region2: #{tpu_custom_call.1} parent=1 // loop_pre_header
      _
    $region3: #{tpu_custom_call.1} parent=1 // loop_header
      %s17 = sphi 0, %s21
      %p18 = scmp.ge.s32.totalorder %s17, 4
      %s24 = sphi 0, %s36
      %s25 = sphi 0, %s32
      %s26 = sphi 0, %s24
      %s27 = sphi 0, %s25
      %s28 = sphi 0, %s26
      %s29 = sphi 0, %s27
      %s41 = sphi 0, %s43
      %s44 = sphi 0, %s41
      %s45 = sphi 0, %s44
      %s61 = sphi 0, %s45
      %s69 = sphi 0, %s71
      %s72 = sphi 0, %s69
      %s73 = sphi 0, %s72
      %s89 = sphi 0, %s73
      %s97 = sphi 0, %s99
      %s100 = sphi 0, %s97
      %s101 = sphi 0, %s100
      %s117 = sphi 0, %s101
      %s125 = sphi 0, %s127
      %s128 = sphi 0, %s125
      %s129 = sphi 0, %s128
      %s145 = sphi 0, %s129
      %s153 = sphi 0, %s155
      %s156 = sphi 0, %s153
      %s157 = sphi 0, %s156
      %s173 = sphi 0, %s157
    $region4: #{tpu_custom_call.1} parent=1 // loop_header_branch
      %20 = sbr.rel (%p18) target = $region8
    $region5: #{tpu_custom_call.1} parent=1 // loop_body
      %s22 = ssub.s32 %s17, 1
      %s23 = ssub.s32 %s17, 2
      %s30 = sadd.s32 1, %s25
      %p31 = scmp.ge.s32.totalorder %s30, 1
      %s32 = scalar_select %p31, 0, %s30
      %s33 = sadd.s32 1, %s24
      %s34 = scalar_select %p31, %s33, %s24
      %p35 = scmp.ge.s32.totalorder %s34, 2
      %s36 = scalar_select %p35, 0, %s34
      %s37 = ssub.s32 %s24, %s36
      %s38 = ssub.s32 %s25, %s32
      %s39 = sor.u32 %s37, %s38
      %p40 = scmp.eq.s32.totalorder %s39, 0
      %s42 = sadd.s32 %s41, 1
      %s43 = scalar_select %p40, %s41, %s42
      %p46 = pneg %p40
      %p47 = scmp.eq.s32.totalorder %s17, 1
      %p48 = por %p46, %p47
      %p49 = scmp.ne.s32.totalorder %s41, %s44
      %p50 = scmp.eq.s32.totalorder %s17, 0
      %p51 = por %p49, %p50
      %p52 = scmp.ne.s32.totalorder %s41, %s44
      %p53 = scmp.eq.s32.totalorder %s22, 1
      %p54 = por %p52, %p53
      %p55 = scmp.ne.s32.totalorder %s44, %s45
      %p56 = scmp.eq.s32.totalorder %s22, 0
      %p57 = por %p55, %p56
      %p58 = scmp.ne.s32.totalorder %s44, %s45
      %p59 = scmp.eq.s32.totalorder %s23, 1
      %p60 = por %p58, %p59
      %p62 = scmp.ne.s32.totalorder %s45, %s61
      %p63 = scmp.eq.s32.totalorder %s23, 0
      %p64 = por %p62, %p63
      %s65 = ssub.s32 %s24, %s36
      %s66 = ssub.s32 %s25, %s32
      %s67 = sor.u32 %s65, %s66
      %p68 = scmp.eq.s32.totalorder %s67, 0
      %s70 = sadd.s32 %s69, 1
      %s71 = scalar_select %p68, %s69, %s70
      %p74 = pneg %p68
      %p75 = scmp.eq.s32.totalorder %s17, 1
      %p76 = por %p74, %p75
      %p77 = scmp.ne.s32.totalorder %s69, %s72
      %p78 = scmp.eq.s32.totalorder %s17, 0
      %p79 = por %p77, %p78
      %p80 = scmp.ne.s32.totalorder %s69, %s72
      %p81 = scmp.eq.s32.totalorder %s22, 1
      %p82 = por %p80, %p81
      %p83 = scmp.ne.s32.totalorder %s72, %s73
      %p84 = scmp.eq.s32.totalorder %s22, 0
      %p85 = por %p83, %p84
      %p86 = scmp.ne.s32.totalorder %s72, %s73
      %p87 = scmp.eq.s32.totalorder %s23, 1
      %p88 = por %p86, %p87
      %p90 = scmp.ne.s32.totalorder %s73, %s89
      %p91 = scmp.eq.s32.totalorder %s23, 0
      %p92 = por %p90, %p91
      %s93 = ssub.s32 %s24, %s36
      %s94 = ssub.s32 %s25, %s32
      %s95 = sor.u32 %s93, %s94
      %p96 = scmp.eq.s32.totalorder %s95, 0
      %s98 = sadd.s32 %s97, 1
      %s99 = scalar_select %p96, %s97, %s98
      %p102 = pneg %p96
      %p103 = scmp.eq.s32.totalorder %s17, 1
      %p104 = por %p102, %p103
      %p105 = scmp.ne.s32.totalorder %s97, %s100
      %p106 = scmp.eq.s32.totalorder %s17, 0
      %p107 = por %p105, %p106
      %p108 = scmp.ne.s32.totalorder %s97, %s100
      %p109 = scmp.eq.s32.totalorder %s22, 1
      %p110 = por %p108, %p109
      %p111 = scmp.ne.s32.totalorder %s100, %s101
      %p112 = scmp.eq.s32.totalorder %s22, 0
      %p113 = por %p111, %p112
      %p114 = scmp.ne.s32.totalorder %s100, %s101
      %p115 = scmp.eq.s32.totalorder %s23, 1
      %p116 = por %p114, %p115
      %p118 = scmp.ne.s32.totalorder %s101, %s117
      %p119 = scmp.eq.s32.totalorder %s23, 0
      %p120 = por %p118, %p119
      %s121 = sadd.s32 %s24, %s25
      %s122 = sadd.s32 %s36, %s32
      %s123 = ssub.s32 %s121, %s122
      %p124 = scmp.eq.s32.totalorder %s123, 0
      %s126 = sadd.s32 %s125, 1
      %s127 = scalar_select %p124, %s125, %s126
      %p130 = pneg %p124
      %p131 = scmp.eq.s32.totalorder %s17, 1
      %p132 = por %p130, %p131
      %p133 = scmp.ne.s32.totalorder %s125, %s128
      %p134 = scmp.eq.s32.totalorder %s17, 0
      %p135 = por %p133, %p134
      %p136 = scmp.ne.s32.totalorder %s125, %s128
      %p137 = scmp.eq.s32.totalorder %s22, 1
      %p138 = por %p136, %p137
      %p139 = scmp.ne.s32.totalorder %s128, %s129
      %p140 = scmp.eq.s32.totalorder %s22, 0
      %p141 = por %p139, %p140
      %p142 = scmp.ne.s32.totalorder %s128, %s129
      %p143 = scmp.eq.s32.totalorder %s23, 1
      %p144 = por %p142, %p143
      %p146 = scmp.ne.s32.totalorder %s129, %s145
      %p147 = scmp.eq.s32.totalorder %s23, 0
      %p148 = por %p146, %p147
      %s149 = sadd.s32 %s24, %s25
      %s150 = sadd.s32 %s36, %s32
      %s151 = ssub.s32 %s149, %s150
      %p152 = scmp.eq.s32.totalorder %s151, 0
      %s154 = sadd.s32 %s153, 1
      %s155 = scalar_select %p152, %s153, %s154
      %p158 = pneg %p152
      %p159 = scmp.eq.s32.totalorder %s17, 1
      %p160 = por %p158, %p159
      %p161 = scmp.ne.s32.totalorder %s153, %s156
      %p162 = scmp.eq.s32.totalorder %s17, 0
      %p163 = por %p161, %p162
      %p164 = scmp.ne.s32.totalorder %s153, %s156
      %p165 = scmp.eq.s32.totalorder %s22, 1
      %p166 = por %p164, %p165
      %p167 = scmp.ne.s32.totalorder %s156, %s157
      %p168 = scmp.eq.s32.totalorder %s22, 0
      %p169 = por %p167, %p168
      %p170 = scmp.ne.s32.totalorder %s156, %s157
      %p171 = scmp.eq.s32.totalorder %s23, 1
      %p172 = por %p170, %p171
      %p174 = scmp.ne.s32.totalorder %s157, %s173
      %p175 = scmp.eq.s32.totalorder %s23, 0
      %p176 = por %p174, %p175
      %p177 = scmp.le.s32.totalorder 1, %s17
      %p178 = scmp.lt.s32.totalorder %s17, 3
      %p179 = pnand %p177, %p178
      %p180 = pneg %p179
      // Predicated region
      $region9: #{tpu_custom_call.1} parent=5 // pred_check
        _
      $region10: #{tpu_custom_call.1} parent=5 // pred_check_branch
        %182 = sbr.rel (%p179) target = $region12
      $region11: #{tpu_custom_call.1} parent=5 // pred_region
        %s183 = ssub.s32 %s17, 1
      $region12: #{tpu_custom_call.1} parent=5 // pred_fallthru
        _
      %p184 = scmp.lt.s32.totalorder %s17, 2
      // Predicated region
      $region13: #{tpu_custom_call.1} parent=5 // pred_check
        %p185 = pneg %p184
      $region14: #{tpu_custom_call.1} parent=5 // pred_check_branch
        %187 = sbr.rel (%p185) target = $region16
      $region15: #{tpu_custom_call.1} parent=5 // pred_region
        // Predicated region
        $region17: #{tpu_custom_call.1} parent=15 // pred_check
          %p188 = pneg %p51
        $region18: #{tpu_custom_call.1} parent=15 // pred_check_branch
          %190 = sbr.rel (%p188) target = $region20
        $region19: #{tpu_custom_call.1} parent=15 // pred_region
          %s191 = sand.u32 %s41, 1
          %s192 = scalar_lea.sflag [#allocation3], %s191
          %s193 = sand.u32 %s41, 1
          %s194 = smul.addr %s193, 16
          %s195 = scalar_lea.vmem [#allocation2], %s194
          %s197 = ssub.s32 256, 256
          %198 = vsyncadd %s192, %s197
          %s199 = smul.addr %s24, 2
          %s200 = sadd.s32 %s25, %s199
          %s201 = smul.addr %s200, 128
          %s202 = scalar_lea.hbm %s0, %s201
          %s203 = sshll.u32 %s195, 4
          %s204 = int_to_ptr.vmem [resolvable:$true] %s203
          %209 = dma.hbm_to_vmem [thread:$0]  %s202, 256, %s204, %s192, 128, 128, 8
        $region20: #{tpu_custom_call.1} parent=15 // pred_fallthru
          _
        // Predicated region
        $region21: #{tpu_custom_call.1} parent=15 // pred_check
          %p210 = pneg %p79
        $region22: #{tpu_custom_call.1} parent=15 // pred_check_branch
          %212 = sbr.rel (%p210) target = $region24
        $region23: #{tpu_custom_call.1} parent=15 // pred_region
          %s213 = sand.u32 %s17, 1
          %s214 = scalar_lea.sflag [#allocation5], %s213
          %s215 = sand.u32 %s69, 1
          %s216 = smul.addr %s215, 4
          %s217 = scalar_lea.vmem [#allocation4], %s216
          %s219 = ssub.s32 64, 64
          %220 = vsyncadd %s214, %s219
          %s221 = smul.addr %s24, 2
          %s222 = sadd.s32 %s25, %s221
          %s223 = smul.addr %s222, 32
          %s224 = scalar_lea.hbm %s1, %s223
          %s225 = sshll.u32 %s217, 4
          %s226 = int_to_ptr.vmem [resolvable:$true] %s225
          %231 = dma.hbm_to_vmem [thread:$0]  %s224, 64, %s226, %s214, 32, 32, 2
        $region24: #{tpu_custom_call.1} parent=15 // pred_fallthru
          _
        // Predicated region
        $region25: #{tpu_custom_call.1} parent=15 // pred_check
          %p232 = pneg %p107
        $region26: #{tpu_custom_call.1} parent=15 // pred_check_branch
          %234 = sbr.rel (%p232) target = $region28
        $region27: #{tpu_custom_call.1} parent=15 // pred_region
          %s235 = sand.u32 %s17, 1
          %s236 = scalar_lea.sflag [#allocation5], %s235
          %s237 = sand.u32 %s97, 1
          %s238 = smul.addr %s237, 4
          %s239 = scalar_lea.vmem [#allocation6], %s238
          %s241 = ssub.s32 64, 64
          %242 = vsyncadd %s236, %s241
          %s243 = smul.addr %s24, 2
          %s244 = sadd.s32 %s25, %s243
          %s245 = smul.addr %s244, 32
          %s246 = scalar_lea.hbm %s2, %s245
          %s247 = sshll.u32 %s239, 4
          %s248 = int_to_ptr.vmem [resolvable:$true] %s247
          %253 = dma.hbm_to_vmem [thread:$0]  %s246, 64, %s248, %s236, 32, 32, 2
        $region28: #{tpu_custom_call.1} parent=15 // pred_fallthru
          _
      $region16: #{tpu_custom_call.1} parent=5 // pred_fallthru
        _
      %p254 = scmp.le.s32.totalorder 1, %s17
      %p255 = scmp.lt.s32.totalorder %s17, 3
      %p256 = pnand %p254, %p255
      %p257 = pneg %p256
      // Predicated region
      $region29: #{tpu_custom_call.1} parent=5 // pred_check
        _
      $region30: #{tpu_custom_call.1} parent=5 // pred_check_branch
        %259 = sbr.rel (%p256) target = $region32
      $region31: #{tpu_custom_call.1} parent=5 // pred_region
        %s260 = ssub.s32 %s17, 1
        %s261 = sand.u32 %s44, 1
        %s262 = scalar_lea.sflag [#allocation3], %s261
        %s263 = sand.u32 %s44, 1
        %s264 = smul.addr %s263, 16
        %s265 = scalar_lea.vmem [#allocation2], %s264
        // Predicated region
        $region33: #{tpu_custom_call.1} parent=31 // pred_check
          %p266 = pneg %p57
        $region34: #{tpu_custom_call.1} parent=31 // pred_check_branch
          %268 = sbr.rel (%p266) target = $region36
        $region35: #{tpu_custom_call.1} parent=31 // pred_region
          %269 = dma.done %s262, 256
        $region36: #{tpu_custom_call.1} parent=31 // pred_fallthru
          _
        %s270 = sand.u32 %s22, 1
        %s271 = scalar_lea.sflag [#allocation5], %s270
        %s272 = sand.u32 %s72, 1
        %s273 = smul.addr %s272, 4
        %s274 = scalar_lea.vmem [#allocation4], %s273
        // Predicated region
        $region37: #{tpu_custom_call.1} parent=31 // pred_check
          %p275 = pneg %p85
        $region38: #{tpu_custom_call.1} parent=31 // pred_check_branch
          %277 = sbr.rel (%p275) target = $region40
        $region39: #{tpu_custom_call.1} parent=31 // pred_region
          %278 = dma.done %s271, 64
        $region40: #{tpu_custom_call.1} parent=31 // pred_fallthru
          _
        %s279 = sand.u32 %s22, 1
        %s280 = scalar_lea.sflag [#allocation5], %s279
        %s281 = sand.u32 %s100, 1
        %s282 = smul.addr %s281, 4
        %s283 = scalar_lea.vmem [#allocation6], %s282
        // Predicated region
        $region41: #{tpu_custom_call.1} parent=31 // pred_check
          %p284 = pneg %p113
        $region42: #{tpu_custom_call.1} parent=31 // pred_check_branch
          %286 = sbr.rel (%p284) target = $region44
        $region43: #{tpu_custom_call.1} parent=31 // pred_region
          %287 = dma.done %s280, 64
        $region44: #{tpu_custom_call.1} parent=31 // pred_fallthru
          _
        %s288 = sand.u32 %s44, 1
        %s289 = scalar_lea.sflag [#allocation3], %s288
        %s290 = sand.u32 %s44, 1
        %s291 = smul.addr %s290, 16
        %s292 = scalar_lea.vmem [#allocation2], %s291
        %p293 = pneg %p57
        %p294 = pneg %p54
        %s295 = sand.u32 %s22, 1
        %s296 = scalar_lea.sflag [#allocation5], %s295
        %s297 = sand.u32 %s72, 1
        %s298 = smul.addr %s297, 4
        %s299 = scalar_lea.vmem [#allocation4], %s298
        %p300 = pneg %p85
        %p301 = pneg %p82
        %s302 = sand.u32 %s22, 1
        %s303 = scalar_lea.sflag [#allocation5], %s302
        %s304 = sand.u32 %s100, 1
        %s305 = smul.addr %s304, 4
        %s306 = scalar_lea.vmem [#allocation6], %s305
        %p307 = pneg %p113
        %p308 = pneg %p110
        %p309 = pneg %p141
        %p310 = pneg %p138
        %s311 = sadd.s32 %s26, %s27
        %p312 = scmp.lt.s32.totalorder %s311, 1
        %s313 = scalar_select %p312, %s311, 1
        %s314 = scalar_lea.vmem %s3, %s313
        %p315 = pneg %p169
        %p316 = pneg %p166
        %s317 = sadd.s32 %s26, %s27
        %p318 = scmp.lt.s32.totalorder %s317, 1
        %s319 = scalar_select %p318, %s317, 1
        %s320 = scalar_lea.vmem %s4, %s319
        %s321 = sadd.s32 %s26, %s27
        %p322 = scmp.lt.s32.totalorder %s321, 1
        %s323 = scalar_select %p322, %s321, 1
        %s324 = scalar_lea.vmem %s3, %s323
        %s325 = sadd.s32 %s26, %s27
        %s326 = sadd.s32 %s26, %s27
        %p327 = scmp.lt.s32.totalorder %s326, 1
        %s328 = scalar_select %p327, %s326, 1
        %s329 = scalar_lea.vmem %s4, %s328
        %s330 = sadd.s32 %s26, %s27
        %v331 = vld [vmem:[%s265] sm:$0xff]
        %v332 = vld [vmem:[%s265 + $0x8] sm:$0xff]
        %v333 = vld [vmem:[%s274] sm:$0x3]
        %v334 = vld [vmem:[%s274 + $0x2] sm:$0x3]
        %v335 = vunpack.c.0.s8 %v333
        %v336 = vunpack.c.0.s8 %v334
        %v337 = vcvt.s32.f32 %v335
        %v338 = vcvt.s32.f32 %v336
        %v339 = vld [vmem:[%s283] sm:$0x3]
        %v340 = vld [vmem:[%s283 + $0x2] sm:$0x3]
        %v341 = vunpack.c.0.s8 %v339
        %v342 = vunpack.c.0.s8 %v340
        %v343 = vcvt.s32.f32 %v341
        %v344 = vcvt.s32.f32 %v342
        %v345 = vsub.f32 1.0, %v337
        %v346 = vsub.f32 1.0, %v338
        %v347 = vmul.f32 %v345, %v343
        %v348 = vmul.f32 %v346, %v344
        %v349 = vmul.f32 %v331, %v347
        %v350 = vmul.f32 %v332, %v348
        %vm351 = vcmask 130048
        %v352 = vsel %vm351, %v349, -inf
        %v353 = vsel %vm351, %v350, -inf
        %v354 = vmax.f32 %v352, %v353
        %v355 = vrot.slane %v354, 4
        %v356 = vmax.f32 %v354, %v355
        %v357 = vrot.slane %v356, 2
        %v358 = vmax.f32 %v356, %v357
        %v359 = vrot.slane %v358, 1
        %v360 = vmax.f32 %v358, %v359
        %v361 = vadd.f32 %v360, 1.0
        %v362 = vmul.f32 %v331, %v337
        %v363 = vmul.f32 %v332, %v338
        %v364 = vsel %vm351, %v362, inf
        %v365 = vsel %vm351, %v363, inf
        %v366 = vmin.f32 %v364, %v365
        %v367 = vrot.slane %v366, 4
        %v368 = vmin.f32 %v366, %v367
        %v369 = vrot.slane %v368, 2
        %v370 = vmin.f32 %v368, %v369
        %v371 = vrot.slane %v370, 1
        %v372 = vmin.f32 %v370, %v371
        %v373 = vsub.f32 %v372, 1.0
        %v374 = vsub.f32 %v361, %v331
        %v375 = vsub.f32 %v361, %v332
        %v376 = vmax.f32 %v374, 0.0
        %v377 = vmax.f32 %v375, 0.0
        %v378 = vmul.f32 %v376, %v337
        %v379 = vmul.f32 %v377, %v338
        %v380 = vsub.f32 %v331, %v373
        %v381 = vsub.f32 %v332, %v373
        %v382 = vmax.f32 %v380, 0.0
        %v383 = vmax.f32 %v381, 0.0
        %v384 = vmul.f32 %v382, %v347
        %v385 = vmul.f32 %v383, %v348
        %v386 = vsel %vm351, %v378, 0.0
        %v387 = vsel %vm351, %v379, 0.0
        %v388 = vadd.f32 %v386, %v387
        %389 = vadd.xlane.f32.xlu0 %v388
        %v390 = vpop.xlane.xlu0 %389
        %v391 = vrot.slane %v390, 4
        %v392 = vadd.f32 %v390, %v391
        %v393 = vrot.slane %v392, 2
        %v394 = vadd.f32 %v392, %v393
        %v395 = vrot.slane %v394, 1
        %v396 = vadd.f32 %v394, %v395
        %s397 = vtos %v396
        %v398 = vstv %s397
        %vm399 = vcmask 0
        %400 = vst.msk [vmem:[%s324] sm:$0x1] %vm399, %v398
        %v401 = vsel %vm351, %v384, 0.0
        %v402 = vsel %vm351, %v385, 0.0
        %v403 = vadd.f32 %v401, %v402
        %404 = vadd.xlane.f32.xlu0 %v403
        %v405 = vpop.xlane.xlu0 %404
        %v406 = vrot.slane %v405, 4
        %v407 = vadd.f32 %v405, %v406
        %v408 = vrot.slane %v407, 2
        %v409 = vadd.f32 %v407, %v408
        %v410 = vrot.slane %v409, 1
        %v411 = vadd.f32 %v409, %v410
        %s412 = vtos %v411
        %v413 = vstv %s412
        %414 = vst.msk [vmem:[%s329] sm:$0x1] %vm399, %v413
        %s415 = sadd.s32 %s26, %s27
        %p416 = scmp.lt.s32.totalorder %s415, 1
        %s417 = scalar_select %p416, %s415, 1
        %s418 = scalar_lea.vmem %s3, %s417
        %s419 = sadd.s32 %s26, %s27
        %p420 = scmp.lt.s32.totalorder %s419, 1
        %s421 = scalar_select %p420, %s419, 1
        %s422 = scalar_lea.vmem %s4, %s421
        // Predicated region
        $region45: #{tpu_custom_call.1} parent=31 // pred_check
          %p423 = pneg %p138
        $region46: #{tpu_custom_call.1} parent=31 // pred_check_branch
          %425 = sbr.rel (%p423) target = $region48
        $region47: #{tpu_custom_call.1} parent=31 // pred_region
          %s426 = sadd.s32 %s26, %s27
        $region48: #{tpu_custom_call.1} parent=31 // pred_fallthru
          _
        // Predicated region
        $region49: #{tpu_custom_call.1} parent=31 // pred_check
          %p427 = pneg %p166
        $region50: #{tpu_custom_call.1} parent=31 // pred_check_branch
          %429 = sbr.rel (%p427) target = $region52
        $region51: #{tpu_custom_call.1} parent=31 // pred_region
          %s430 = sadd.s32 %s26, %s27
        $region52: #{tpu_custom_call.1} parent=31 // pred_fallthru
          _
      $region32: #{tpu_custom_call.1} parent=5 // pred_fallthru
        _
      %p431 = scmp.le.s32.totalorder 2, %s17
      // Predicated region
      $region53: #{tpu_custom_call.1} parent=5 // pred_check
        %p432 = pneg %p431
      $region54: #{tpu_custom_call.1} parent=5 // pred_check_branch
        %434 = sbr.rel (%p432) target = $region56
      $region55: #{tpu_custom_call.1} parent=5 // pred_region
        %s435 = ssub.s32 %s17, 2
        // Predicated region
        $region57: #{tpu_custom_call.1} parent=55 // pred_check
          %p436 = pneg %p144
        $region58: #{tpu_custom_call.1} parent=55 // pred_check_branch
          %438 = sbr.rel (%p436) target = $region60
        $region59: #{tpu_custom_call.1} parent=55 // pred_region
          %s439 = sadd.s32 %s28, %s29
          %p440 = scmp.lt.s32.totalorder %s439, 1
          %s441 = scalar_select %p440, %s439, 1
          %s442 = scalar_lea.vmem %s3, %s441
        $region60: #{tpu_custom_call.1} parent=55 // pred_fallthru
          _
        // Predicated region
        $region61: #{tpu_custom_call.1} parent=55 // pred_check
          %p443 = pneg %p172
        $region62: #{tpu_custom_call.1} parent=55 // pred_check_branch
          %445 = sbr.rel (%p443) target = $region64
        $region63: #{tpu_custom_call.1} parent=55 // pred_region
          %s446 = sadd.s32 %s28, %s29
          %p447 = scmp.lt.s32.totalorder %s446, 1
          %s448 = scalar_select %p447, %s446, 1
          %s449 = scalar_lea.vmem %s4, %s448
        $region64: #{tpu_custom_call.1} parent=55 // pred_fallthru
          _
      $region56: #{tpu_custom_call.1} parent=5 // pred_fallthru
        _
    $region6: #{tpu_custom_call.1} parent=1 // loop_footer
      %s21 = sadd.s32 1, %s17
    $region7: #{tpu_custom_call.1} parent=1 // loop_footer_branch
      %16 = sbr.rel target = $region3
    $region8: #{tpu_custom_call.1} parent=1 // loop_exit
      _
    %450 = vsyncpa [#allocation3], 1
    %s451 = scalar_lea.sflag [#allocation3], 1
    %452 = vsyncpa %s451, 1
    %453 = vsyncpa [#allocation5], 1
    %s454 = scalar_lea.sflag [#allocation5], 1
    %455 = vsyncpa %s454, 1

</llo_original>
